<compile_context>
chip_gen: v7x
topology: tpu7x:2x2x1
jax: 0.10.0
libtpu: 0.0.40
codegen_flags: <defaults>
</compile_context>

<pallas_src>
import numpy as np
import jax
import jax.numpy as jnp
from jax.experimental import pallas as pl
from jax.experimental.pallas import tpu as pltpu

_TWO_PI = 2.0 * np.pi
_HALF_PI = 0.5 * np.pi


def _round_up(n, m):
    return ((n + m - 1) // m) * m


def _round_down_mult(n, m):
    return max(m, (n // m) * m)


def _gfp_kernel(x_ref, wcat_ref, phase_ref, o_ref):
    # x_ref: (TB, 1) f32, wcat_ref/phase_ref: (1, E) f32, o_ref: (TB, E) f32
    # out = sin(x * 2*pi*[W, W] + [0, pi/2]) == [sin(2*pi*x*W), cos(2*pi*x*W)]
    # One broadcast mul + add (VPU) and one transcendental pass (EUP/VPU) over
    # lane-dense (TB, E) vregs; single unmasked full-width store.
    o_ref[...] = jnp.sin(x_ref[...] * wcat_ref[...] + phase_ref[...])


def _choose_block_b(B, embed_dim, *, target_out_tile_bytes, vmem_tile_budget_bytes):
    """Pick the batch tile TB (rows per grid step)."""
    # Rows implied by the target output-tile size (multi-MiB amortizes the
    # ~0.35us per-grid-step overhead).
    tb = _round_down_mult(target_out_tile_bytes // (4 * embed_dim), 8)
    # VMEM safety: double-buffered x tile (lane-padded to 128 lanes in VMEM!)
    # plus double-buffered output tile, both f32.
    bytes_per_row = 2 * 4 * (128 + embed_dim)
    tb = min(tb, _round_down_mult(vmem_tile_budget_bytes // bytes_per_row, 8))
    # Keep >= 2 grid steps for megacore (v7x: 2 TCs) once the batch is large
    # enough that each half-tile is still a decent block.
    half_b = _round_up((B + 1) // 2, 8)
    if half_b >= 512:
        tb = min(tb, half_b)
    if tb >= B:
        return B  # single full-extent block (valid even when B % 8 != 0)
    return tb  # multiple of 8 -> partial last block is fine


def gaussian_fourier_projection(x, W, *, block_b=None,
                                target_out_tile_bytes=4 << 20,
                                vmem_tile_budget_bytes=12 << 20):
    """x: (B,) f32 time steps; W: (half,) fixed random weights.

    Returns (B, 2*half) = concat([sin(2*pi*x*W), cos(2*pi*x*W)], axis=-1).
    """
    B = int(x.shape[0])
    half = int(W.shape[0])
    embed_dim = 2 * half

    x2d = x.reshape(B, 1).astype(jnp.float32)

    # W is a fixed (non-trainable) parameter: fold 2*pi and the cos->sin phase
    # in once, outside the hot path. (In a real module these would be cached
    # at init time.)
    w_f32 = W.astype(jnp.float32)
    w_cat = (jnp.concatenate([w_f32, w_f32]) * jnp.float32(_TWO_PI)
             ).reshape(1, embed_dim)
    phase = jnp.concatenate(
        [jnp.zeros((half,), jnp.float32),
         jnp.full((half,), _HALF_PI, jnp.float32)]).reshape(1, embed_dim)

    if block_b is None:
        TB = _choose_block_b(B, embed_dim,
                             target_out_tile_bytes=target_out_tile_bytes,
                             vmem_tile_budget_bytes=vmem_tile_budget_bytes)
    else:
        TB = min(int(block_b), B)
        if TB < B:
            TB = _round_down_mult(TB, 8)

    grid = (pl.cdiv(B, TB),)

    return pl.pallas_call(
        _gfp_kernel,
        out_shape=jax.ShapeDtypeStruct((B, embed_dim), jnp.float32),
        grid_spec=pl.GridSpec(
            grid=grid,
            in_specs=[
                pl.BlockSpec((TB, 1), lambda i: (i, 0)),
                pl.BlockSpec((1, embed_dim), lambda i: (0, 0)),  # W stays resident
                pl.BlockSpec((1, embed_dim), lambda i: (0, 0)),  # phase resident
            ],
            out_specs=pl.BlockSpec((TB, embed_dim), lambda i: (i, 0)),
        ),
        compiler_params=pltpu.CompilerParams(
            dimension_semantics=("parallel",),   # no reduction axis
            vmem_limit_bytes=32 << 20,           # safe on v7x; ample on v5e/v6e
        ),
    )(x2d, w_cat, phase)


def reference(x, W):
    x_proj = x[:, None] * W[None, :] * 2.0 * np.pi
    return jnp.concatenate([jnp.sin(x_proj), jnp.cos(x_proj)], axis=-1)


def _check(out, ref):
    # Folding 2*pi into W and using cos(t) = sin(t + pi/2) reorders f32
    # rounding of the (large-magnitude) sin/cos arguments; the resulting
    # output deviation is bounded by ~2*eps*|2*pi*x*W| (< ~1e-4 here since
    # |W| <~ 100), so compare with atol = 5e-4.
    np.testing.assert_allclose(np.asarray(out), np.asarray(ref),
                               rtol=1e-4, atol=5e-4)


if __name__ == "__main__":
    embed_dim = 128   # -> W has embed_dim // 2 = 64 entries
    scale = 30.0

    key = jax.random.PRNGKey(0)
    kw, kx = jax.random.split(key)

    # Deterministic parameter init, mirrors torch.randn(embed_dim // 2) * scale
    W = jax.random.normal(kw, (embed_dim // 2,), dtype=jnp.float32) * scale

    # Case 1: batch that is a multiple of the sublane width (single block).
    batch = 8
    x = jax.random.uniform(kx, (batch,), dtype=jnp.float32)
    out = jax.block_until_ready(gaussian_fourier_projection(x, W))
    assert out.shape == (batch, embed_dim), out.shape
    _check(out, reference(x, W))

    # Case 2: ragged batch handled as a single full-extent block (no padding,
    # no trailing slice).
    batch2 = 5
    x2 = jax.random.uniform(jax.random.PRNGKey(1), (batch2,), dtype=jnp.float32)
    out2 = jax.block_until_ready(gaussian_fourier_projection(x2, W))
    assert out2.shape == (batch2, embed_dim), out2.shape
    _check(out2, reference(x2, W))

    # Case 3: force a small batch tile to exercise the multi-step grid with a
    # masked partial last block (20 rows, TB=8 -> 3 grid steps).
    batch3 = 20
    x3 = jax.random.uniform(jax.random.PRNGKey(2), (batch3,), dtype=jnp.float32)
    out3 = jax.block_until_ready(gaussian_fourier_projection(x3, W, block_b=8))
    assert out3.shape == (batch3, embed_dim), out3.shape
    _check(out3, reference(x3, W))

    print("KERNEL_OK")
</pallas_src>

<mosaic_0001>
module attributes {stable_mosaic.version = 11 : i64} {
  func.func @_gfp_kernel(%arg0: i32, %arg1: memref<8x1xf32, #tpu.memory_space<vmem>>, %arg2: memref<1x128xf32, #tpu.memory_space<vmem>>, %arg3: memref<1x128xf32, #tpu.memory_space<vmem>>, %arg4: memref<8x128xf32, #tpu.memory_space<vmem>>) attributes {dimension_semantics = [#tpu.dimension_semantics<parallel>], iteration_bounds = array<i64: 1>, scalar_prefetch = 0 : i64, scratch_operands = 0 : i64, tpu.core_type = #tpu.core_type<tc>, window_params = [{transform_indices = @transform_0, window_bounds = array<i64: 8, 1>}, {pipeline_mode = #tpu.pipeline_mode<synchronous>, transform_indices = @transform_1, window_bounds = array<i64: 1, 128>}, {pipeline_mode = #tpu.pipeline_mode<synchronous>, transform_indices = @transform_2, window_bounds = array<i64: 1, 128>}, {transform_indices = @transform_3, window_bounds = array<i64: 8, 128>}]} {
    %c0 = arith.constant 0 : index
    %c0_0 = arith.constant 0 : index
    %0 = vector.load %arg1[%c0, %c0_0] : memref<8x1xf32, #tpu.memory_space<vmem>>, vector<8x1xf32>
    %c0_1 = arith.constant 0 : index
    %c0_2 = arith.constant 0 : index
    %1 = vector.load %arg2[%c0_1, %c0_2] : memref<1x128xf32, #tpu.memory_space<vmem>>, vector<1x128xf32>
    %2 = vector.broadcast %0 : vector<8x1xf32> to vector<8x128xf32>
    %3 = vector.broadcast %1 : vector<1x128xf32> to vector<8x128xf32>
    %4 = arith.mulf %2, %3 : vector<8x128xf32>
    %c0_3 = arith.constant 0 : index
    %c0_4 = arith.constant 0 : index
    %5 = vector.load %arg3[%c0_3, %c0_4] : memref<1x128xf32, #tpu.memory_space<vmem>>, vector<1x128xf32>
    %6 = vector.broadcast %5 : vector<1x128xf32> to vector<8x128xf32>
    %7 = arith.addf %4, %6 : vector<8x128xf32>
    %8 = math.sin %7 : vector<8x128xf32>
    %c0_5 = arith.constant 0 : index
    %c0_6 = arith.constant 0 : index
    %9 = vector.load %arg4[%c0_5, %c0_6] : memref<8x128xf32, #tpu.memory_space<vmem>>, vector<8x128xf32>
    tpu.vector_store %arg4[%c0_5, %c0_6], %8 {strides = array<i32>} : memref<8x128xf32, #tpu.memory_space<vmem>>, vector<8x128xf32>,
    return
  }
  func.func @transform_0(%arg0: i32) -> (i32, i32) {
    %c0_i32 = arith.constant 0 : i32
    %c0_i32_0 = arith.constant 0 : i32
    return %arg0, %c0_i32 : i32, i32
  }
  func.func @transform_1(%arg0: i32) -> (i32, i32) {
    %c0_i32 = arith.constant 0 : i32
    %c0_i32_0 = arith.constant 0 : i32
    %c0_i32_1 = arith.constant 0 : i32
    return %c0_i32, %c0_i32_0 : i32, i32
  }
  func.func @transform_2(%arg0: i32) -> (i32, i32) {
    %c0_i32 = arith.constant 0 : i32
    %c0_i32_0 = arith.constant 0 : i32
    %c0_i32_1 = arith.constant 0 : i32
    return %c0_i32, %c0_i32_0 : i32, i32
  }
  func.func @transform_3(%arg0: i32) -> (i32, i32) {
    %c0_i32 = arith.constant 0 : i32
    %c0_i32_0 = arith.constant 0 : i32
    return %arg0, %c0_i32 : i32, i32
  }
}

</mosaic_0001>

<llo_original>
// kernel: tpu_custom_call.1
$region0: #{tpu_custom_call.1}
  #allocation0 [shape = 'u32[]', space=smem, size = 0x4, offset = 0x4, fixed_abs, tag = 'smem constant byte address 0x4 - core index']
  #allocation1 [shape = 'u32[144,128]{1,0:T(1,128)}', space=vmem, size = 0x12000, scoped, tag = 'internal scratch']
  %s0 = inlined_call_operand.vmem [shape: f32[8,1], index: 0, kind: input, shape index: {}]
  %s1 = inlined_call_operand.vmem [shape: f32[1,128], index: 1, kind: input, shape index: {}]
  %s2 = inlined_call_operand.vmem [shape: f32[1,128], index: 2, kind: input, shape index: {}]
  %s3 = inlined_call_operand.hbm [shape: f32[8,128], index: 3, kind: output, shape index: {}]
  %s4 = sld [smem:[#allocation0]]
  $region22: #{tpu_custom_call.1} parent=0
    _
  %s6 = ssub.s32 1, %s4
  %s7 = scalar_select 0, %s6, %s4
  $region1: #{tpu_custom_call.1} parent=0
    #allocation2 [shape = 'u8[4096]{0}', space=vmem, size = 0x1000, scoped, tag = 'output window, operand 0, single buffered']
    #allocation3 [shape = 's32[1]{0}', space=sflag, size = 0x4, scoped, tag = 'scoped memory for tpu_custom_call.1']
    %8 = vsyncpa [#allocation3], 0
    // Predicated region
    $region2: #{tpu_custom_call.1} parent=1 // pred_check
      _
    $region3: #{tpu_custom_call.1} parent=1 // pred_check_branch
      %10 = sbr.rel (0) target = $region5
    $region4: #{tpu_custom_call.1} parent=1 // pred_region
      _
    $region5: #{tpu_custom_call.1} parent=1 // pred_fallthru
      _
    // Predicated region
    $region6: #{tpu_custom_call.1} parent=1 // pred_check
      _
    $region7: #{tpu_custom_call.1} parent=1 // pred_check_branch
      %12 = sbr.rel (0) target = $region9
    $region8: #{tpu_custom_call.1} parent=1 // pred_region
      _
    $region9: #{tpu_custom_call.1} parent=1 // pred_fallthru
      _
    // Predicated region
    $region10: #{tpu_custom_call.1} parent=1 // pred_check
      _
    $region11: #{tpu_custom_call.1} parent=1 // pred_check_branch
      %14 = sbr.rel (0) target = $region13
    $region12: #{tpu_custom_call.1} parent=1 // pred_region
      _
    $region13: #{tpu_custom_call.1} parent=1 // pred_fallthru
      _
    %v15 = vld [vmem:[%s0] sm:$0xff]
    %v16 = vld [vmem:[%s1] sm:$0x1]
    %18 = vset.pattern.permute.xlu0 0
    %19 = vperm.xlu0 %18, %v15
    %v20 = vpop.permute.xlu0 %19
    %v23 = vlaneseq
    %v24 = vshrl.u32 %v23, 7
    %v25 = vsub.s32 0, %v24
    %v26 = vrot.slane %v16, %v25
    %v28 = vmul.f32 %v20, %v26
    %v29 = vld [vmem:[%s2] sm:$0x1]
    %v31 = vlaneseq
    %v32 = vshrl.u32 %v31, 7
    %v33 = vsub.s32 0, %v32
    %v34 = vrot.slane %v29, %v33
    %v36 = vadd.f32 %v28, %v34
    %v37 = vand.u32 2147483647, %v36
    %vm38 = vcmp.le.f32.partialorder %v37, 0.7853982
    %vm39 = vcmp.lt.s32.totalorder %v36, 0
    %v40 = vand.u32 %v36, 2139095040
    %v41 = vshrl.u32 %v40, 23
    %v42 = vsub.s32 %v41, 127
    %v43 = vand.u32 2147483647, %v36
    %v44 = vand.u32 %v43, 8388607
    %v45 = vor.u32 %v44, 8388608
    %v46 = vsub.s32 0, %v45
    %v47 = vadd.s32 %v42, 1
    %vm48 = vcmp.gt.s32.totalorder %v47, 0
    %v49 = vsel %vm48, %v47, 0
    %v50 = vshrl.u32 %v49, 5
    %v51 = vand.u32 %v49, 31
    %v52 = vsub.s32 32, %v51
    %v53 = vshrl.u32 683565275, %v52
    %v54 = vshll.u32 683565275, %v51
    %v55 = vshrl.u32 2475754826, %v52
    %v56 = vor.u32 %v54, %v55
    %v57 = vshll.u32 2475754826, %v51
    %v58 = vshrl.u32 2131351028, %v52
    %v59 = vor.u32 %v57, %v58
    %v60 = vshll.u32 2131351028, %v51
    %v61 = vshrl.u32 2102212464, %v52
    %v62 = vor.u32 %v60, %v61
    %v63 = vshll.u32 2102212464, %v51
    %v64 = vshrl.u32 920167782, %v52
    %v65 = vor.u32 %v63, %v64
    %v66 = vshll.u32 920167782, %v51
    %v67 = vshrl.u32 1326507024, %v52
    %v68 = vor.u32 %v66, %v67
    %vm69 = vcmp.lt.s32.totalorder %v50, 1
    %vm70 = vcmp.lt.s32.totalorder %v50, 2
    %vm71 = vcmp.lt.s32.totalorder %v50, 3
    %vm72 = vcmp.lt.s32.totalorder %v50, 4
    %v73 = vsel %vm69, %v53, %v56
    %v74 = vsel %vm72, %v62, 2102212464
    %v75 = vsel %vm71, %v59, %v74
    %v76 = vsel %vm70, %v73, %v75
    %v77 = vsel %vm69, %v56, %v59
    %v78 = vsel %vm72, %v65, 920167782
    %v79 = vsel %vm71, %v62, %v78
    %v80 = vsel %vm70, %v77, %v79
    %v81 = vsel %vm69, %v59, %v62
    %v82 = vsel %vm72, %v68, 1326507024
    %v83 = vsel %vm71, %v65, %v82
    %v84 = vsel %vm70, %v81, %v83
    %v85 = vshll.u32 %v45, 8
    %v86 = vmul.u32.u64.compose %v85, %v84
    %v87 = vextract.low.u32 %v86
    %v88 = vextract.high.u32 %v86
    %v89 = vmul.u32.u64.compose %v85, %v80
    %v90 = vextract.low.u32 %v89
    %v91 = vextract.high.u32 %v89
    %v92 = vmul.u32 %v85, %v76
    %v93 = vadd.s32 %v88, %v90
    %vm94 = vc.u32 %v88, %v90
    %v95 = vadd.s32 %v91, 1
    %v96 = vsel %vm94, %v95, %v91
    %v97 = vadd.s32 %v92, %v96
    %v98 = vadd.s32 %v97, 536870912
    %v99 = vshrl.u32 %v98, 30
    %v100 = vshll.u32 %v99, 30
    %v101 = vsub.s32 %v97, %v100
    %vm102 = vcmp.lt.s32.totalorder %v101, 0
    %v103 = vsub.s32 0, %v101
    %v104 = vsel %vm102, %v103, %v101
    %v105 = vclz %v104
    %v106 = vsub.s32 %v105, 2
    %vm107 = vcmp.gt.s32.totalorder 0, %v106
    %v108 = vsel %vm107, 0, %v106
    %v109 = vsub.s32 32, %v108
    %v110 = vshll.u32 %v101, %v108
    %v111 = vshrl.u32 %v93, %v109
    %v112 = vor.u32 %v110, %v111
    %v113 = vsub.s32 4294967266, %v108
    %v114 = vadd.s32 %v113, 127
    %v115 = vshll.u32 %v114, 23
    %v116 = vor.u32 4788187, %v115
    %v117 = vand.u32 2147483647, %v116
    %v119 = vcvt.s32.f32 %v112
    %v120 = vmul.f32 %v119, %v117
    %v121 = vxor.u32 %v120, 2147483648
    %v122 = vsel %vm39, %v121, %v120
    %v123 = vsub.s32 4, %v99
    %v124 = vsel %vm39, %v123, %v99
    %v125 = vsel %vm38, %v36, %v122
    %v126 = vsel %vm38, 0, %v124
    %v127 = vcosq.f32.pop %v125
    %v128 = vsinq.f32.pop %v125
    %vm129 = vweird.f32 %v36
    %v130 = vadd.s32 %v126, 3
    %v131 = vand.u32 %v130, 3
    %vm132 = vcmp.lt.s32.totalorder %v131, 2
    %vm133 = vcmp.eq.s32.totalorder %v131, 0
    %v134 = vxor.u32 %v128, 2147483648
    %v135 = vsel %vm133, %v127, %v134
    %vm136 = vcmp.eq.s32.totalorder %v131, 2
    %v137 = vxor.u32 %v127, 2147483648
    %v138 = vsel %vm136, %v137, %v128
    %v139 = vsel %vm132, %v135, %v138
    %v140 = vsel %vm129, nan, %v139
    %141 = vst [vmem:[#allocation2] sm:$0xff] %v140
    // Predicated region
    $region14: #{tpu_custom_call.1} parent=1 // pred_check
      _
    $region15: #{tpu_custom_call.1} parent=1 // pred_check_branch
      %143 = sbr.rel (0) target = $region17
    $region16: #{tpu_custom_call.1} parent=1 // pred_region
      %s145 = ssub.s32 128, 128
      %146 = vsyncadd [#allocation3], %s145
      %s148 = sshll.u32 [#allocation2], 4
      %s149 = int_to_ptr.vmem [resolvable:$true] %s148
      %151 = dma.vmem_to_hbm [thread:$0]  %s149, 128, %s3, [#allocation3]
    $region17: #{tpu_custom_call.1} parent=1 // pred_fallthru
      _
    // Predicated region
    $region18: #{tpu_custom_call.1} parent=1 // pred_check
      _
    $region19: #{tpu_custom_call.1} parent=1 // pred_check_branch
      %153 = sbr.rel (0) target = $region21
    $region20: #{tpu_custom_call.1} parent=1 // pred_region
      %154 = dma.done [#allocation3], 128
    $region21: #{tpu_custom_call.1} parent=1 // pred_fallthru
      _
    %155 = vsyncpa [#allocation3], 1

</llo_original>
